<compile_context>
chip_gen: v7x
topology: tpu7x:2x2x1
jax: 0.10.0
libtpu: 0.0.40
codegen_flags: <defaults>
</compile_context>

<pallas_src>
import jax
import jax.numpy as jnp
import numpy as np
from jax.experimental import pallas as pl
from jax.experimental.pallas import tpu as pltpu

# --------------------------------------------------------------------------
# 1) BiClsRecall: recall from a 2x2 confusion matrix (SMEM scalar path).
# --------------------------------------------------------------------------


def _recall_kernel(cm_ref, out_ref):
    # cm_ref: (4,) f32 in SMEM, ravel order [tn, fp, fn, tp].
    # Read the two needed scalars, then do the arithmetic as (1,1) vector ops
    # (keeps everything on well-supported VPU lowering paths).
    fn = jnp.full((1, 1), cm_ref[2], jnp.float32)
    tp = jnp.full((1, 1), cm_ref[3], jnp.float32)
    den = fn + tp
    safe_den = jnp.where(den > 0.0, den, 1.0)
    out_ref[...] = jnp.where(den > 0.0, tp / safe_den, jnp.zeros_like(tp))


@jax.jit
def bi_cls_recall(confusion_matrix):
    """tp / (fn + tp) with ravel order (tn, fp, fn, tp); 0.0 if fn + tp == 0."""
    cm_flat = confusion_matrix.astype(jnp.float32).reshape(-1)  # (4,)
    out = pl.pallas_call(
        _recall_kernel,
        in_specs=[pl.BlockSpec(memory_space=pltpu.MemorySpace.SMEM)],
        out_shape=jax.ShapeDtypeStruct((1, 1), jnp.float32),
    )(cm_flat)
    return out[0, 0]


# --------------------------------------------------------------------------
# 2) aucScore (AUC + KS) -- optimized per the performance review.
#
# Tile layout: the pairwise tile has the j (sample / contraction) axis on
# sublanes and the i (threshold) axis on lanes, so the weighted sums over j
# are small MXU matmuls (8, TJ) @ (TJ, TI) -> (8, TI) and the resident
# accumulator is lane-dense.
#   acc row 0 : A[i] = sum_j neg_j * [pred_i >  pred_j]   (from wgt @ gt)
#   acc row 1 : B[i] = sum_j pos_j * [pred_i >  pred_j]   (from wgt @ gt)
#   acc row 8 : C[i] = sum_j neg_j * [pred_i == pred_j]   (from wgt @ eq)
# Wrapper:  auc = sum_i pos_i*(A+0.5C) / (n_pos*n_neg)
#           tp[i] = n_pos - B[i], fp[i] = n_neg - A[i]  (complement of `le`)
# --------------------------------------------------------------------------


def _pick_auc_tiles():
    """(TI, TJ, vmem_limit_bytes) -- bigger j tile on 128-MiB-VMEM chips."""
    ti, tj, vmem = 256, 4096, 32 * 1024 * 1024  # safe default (v7x: 64 MiB/TC)
    try:
        kind = jax.devices()[0].device_kind.lower()
    except Exception:  # pragma: no cover - backend query failed, keep defaults
        return ti, tj, vmem
    if ("v5e" in kind) or ("v5 lite" in kind) or ("v5lite" in kind) or ("v6" in kind):
        # v5e / v6e: 128 MiB physical VMEM -> double the j tile, halve the
        # grid-step count; budget (worst case, unfused f32 compare temps):
        #   pred_col 4 MiB x2 + gt/eq bf16 4 MiB x2 + f32 temps 8 MiB x2
        #   + wgt/acc < 0.5 MiB  ~= 34 MiB  < 64 MiB limit.
        tj, vmem = 8192, 64 * 1024 * 1024
    return ti, tj, vmem


TI, TJ, VMEM_LIMIT = _pick_auc_tiles()  # TJ is always a multiple of TI


def _auc_ks_kernel(pred_j_ref, pred_i_ref, wgt_ref, acc_ref):
    # Accumulator resident across the j (reduction) grid axis.
    @pl.when(pl.program_id(1) == 0)
    def _():
        acc_ref[...] = jnp.zeros_like(acc_ref)

    pj = pred_j_ref[...]                       # (TJ, 1)  f32
    pi = pred_i_ref[...]                       # (1, TI)  f32

    # Compare in f32 (tie semantics preserved), cast the exact 0/1 result to
    # bf16 only afterwards so the MXU can do the weighted reductions.
    gt = (pi > pj).astype(jnp.bfloat16)        # (TJ, TI): pred_i > pred_j
    eq = (pi == pj).astype(jnp.bfloat16)       # (TJ, TI)

    wgt = wgt_ref[...]                         # (8, TJ) bf16: rows [neg, pos, 0...]

    acc_ref[0:8, :] = acc_ref[0:8, :] + jnp.dot(
        wgt, gt, preferred_element_type=jnp.float32)
    acc_ref[8:16, :] = acc_ref[8:16, :] + jnp.dot(
        wgt, eq, preferred_element_type=jnp.float32)


@jax.jit
def auc_ks(pred, label):
    """Returns (auc_score, ks) matching roc_curve/auc semantics."""
    n = pred.shape[0]
    npad = ((n + TJ - 1) // TJ) * TJ           # TJ is a multiple of TI

    pred_p = jnp.zeros((npad,), jnp.float32).at[:n].set(pred.astype(jnp.float32))
    label_p = jnp.zeros((npad,), jnp.float32).at[:n].set(label.astype(jnp.float32))
    valid = jnp.zeros((npad,), jnp.float32).at[:n].set(1.0)

    pos = label_p * valid                      # 1 for real positive samples
    neg = (1.0 - label_p) * valid              # 1 for real negative samples

    pred_col = pred_p.reshape(npad, 1)         # j view (sublanes)
    pred_row = pred_p.reshape(1, npad)         # i view (lanes)

    # Single mask-weight matrix for both MXU reductions (0/1 -> exact in bf16).
    wgt = (jnp.zeros((8, npad), jnp.float32)
           .at[0].set(neg)
           .at[1].set(pos)).astype(jnp.bfloat16)

    grid = (npad // TI, npad // TJ)
    n_steps = grid[0] * grid[1]
    cost = pl.CostEstimate(
        # two (8,TJ)@(TJ,TI) matmuls per step, summed over the whole grid
        flops=2 * 2 * 8 * npad * npad,
        transcendentals=0,
        bytes_accessed=n_steps * (TJ * 4 + TI * 4 + 8 * TJ * 2) + 16 * npad * 4,
    )

    acc = pl.pallas_call(
        _auc_ks_kernel,
        grid=grid,
        in_specs=[
            pl.BlockSpec((TJ, 1), lambda i, j: (j, 0)),
            pl.BlockSpec((1, TI), lambda i, j: (0, i)),
            pl.BlockSpec((8, TJ), lambda i, j: (0, j)),
        ],
        out_specs=pl.BlockSpec((16, TI), lambda i, j: (0, i)),
        out_shape=jax.ShapeDtypeStruct((16, npad), jnp.float32),
        compiler_params=pltpu.CompilerParams(
            dimension_semantics=("parallel", "arbitrary"),
            vmem_limit_bytes=VMEM_LIMIT),
        cost_estimate=cost,
    )(pred_col, pred_row, wgt)

    n_pos = jnp.sum(pos)
    n_neg = jnp.sum(neg)

    gt_neg = acc[0]                            # A[i]
    gt_pos = acc[1]                            # B[i]
    eq_neg = acc[8]                            # C[i]

    # AUC numerator (pos_i scaling deferred to the wrapper).
    auc_num = jnp.sum(pos * (gt_neg + 0.5 * eq_neg))
    auc_score = auc_num / (n_pos * n_neg)

    # KS: tp/fp via complement of the >= relation (no `le` compare in-kernel).
    tpr = (n_pos - gt_pos) / n_pos
    fpr = (n_neg - gt_neg) / n_neg
    ks = jnp.maximum(jnp.max(valid * (tpr - fpr)), 0.0)
    return auc_score, ks


# --------------------------------------------------------------------------
# References & smoke test
# --------------------------------------------------------------------------


def _numpy_auc_ks_reference(pred, label):
    """Sort-based roc_curve + trapezoid auc + ks (sklearn semantics)."""
    order = np.argsort(-pred, kind="stable")
    p_s = pred[order]
    l_s = label[order].astype(np.float64)
    tps = np.cumsum(l_s)
    fps = np.cumsum(1.0 - l_s)
    distinct = np.where(np.diff(p_s) != 0)[0]
    idx = np.r_[distinct, len(p_s) - 1]
    tpr = np.r_[0.0, tps[idx] / tps[-1]]
    fpr = np.r_[0.0, fps[idx] / fps[-1]]
    auc_ref = np.sum((fpr[1:] - fpr[:-1]) * (tpr[1:] + tpr[:-1]) * 0.5)
    ks_ref = max(np.max(tpr - fpr), 0.0)
    return auc_ref, ks_ref


if __name__ == "__main__":
    key = jax.random.PRNGKey(0)
    k1, k2 = jax.random.split(key)

    n = 200
    pred = jax.random.uniform(k1, (n,), dtype=jnp.float32)
    label = (jax.random.uniform(k2, (n,)) > 0.5).astype(jnp.float32)
    # guarantee both classes are present
    label = label.at[0].set(1.0).at[1].set(0.0)

    pred_np = np.asarray(pred)
    label_np = np.asarray(label)

    # ---- BiClsRecall (the module spec) ----
    pred_bin = (pred_np >= 0.5).astype(np.float32)
    tn = float(np.sum((label_np == 0) & (pred_bin == 0)))
    fp_ = float(np.sum((label_np == 0) & (pred_bin == 1)))
    fn = float(np.sum((label_np == 1) & (pred_bin == 0)))
    tp = float(np.sum((label_np == 1) & (pred_bin == 1)))
    cm = jnp.array([[tn, fp_], [fn, tp]], dtype=jnp.float32)

    recall = jax.block_until_ready(bi_cls_recall(cm))
    recall_ref = tp / (fn + tp) if (fn + tp) > 0 else 0.0
    assert abs(float(recall) - recall_ref) < 1e-6, (float(recall), recall_ref)

    cm_zero = jnp.array([[7.0, 3.0], [0.0, 0.0]], dtype=jnp.float32)
    recall_zero = jax.block_until_ready(bi_cls_recall(cm_zero))
    assert abs(float(recall_zero)) < 1e-6, float(recall_zero)

    # ---- aucScore (previously reviewed kernel, now optimized) ----
    auc_score, ks = jax.block_until_ready(auc_ks(pred, label))
    auc_ref, ks_ref = _numpy_auc_ks_reference(pred_np, label_np)
    assert abs(float(auc_score) - auc_ref) < 1e-5, (float(auc_score), auc_ref)
    assert abs(float(ks) - ks_ref) < 1e-5, (float(ks), ks_ref)

    print("KERNEL_OK")
</pallas_src>

<mosaic_0001>
module attributes {stable_mosaic.version = 11 : i64} {
  func.func @_recall_kernel(%arg0: memref<4xf32, #tpu.memory_space<smem>>, %arg1: memref<1x1xf32, #tpu.memory_space<vmem>>) attributes {dimension_semantics = [], scalar_prefetch = 0 : i64, scratch_operands = 0 : i64, tpu.core_type = #tpu.core_type<tc>} {
    %c2 = arith.constant 2 : index
    %0 = memref.load %arg0[%c2] : memref<4xf32, #tpu.memory_space<smem>>
    %1 = vector.broadcast %0 : f32 to vector<1x1xf32>
    %c3 = arith.constant 3 : index
    %2 = memref.load %arg0[%c3] : memref<4xf32, #tpu.memory_space<smem>>
    %3 = vector.broadcast %2 : f32 to vector<1x1xf32>
    %4 = arith.addf %1, %3 : vector<1x1xf32>
    %cst = arith.constant 0.000000e+00 : f32
    %5 = vector.broadcast %cst : f32 to vector<1x1xf32>
    %6 = arith.cmpf ogt, %4, %5 : vector<1x1xf32>
    %cst_0 = arith.constant 1.000000e+00 : f32
    %7 = vector.broadcast %cst_0 : f32 to vector<1x1xf32>
    %8 = arith.select %6, %4, %7 : vector<1x1xi1>, vector<1x1xf32>
    %cst_1 = arith.constant 0.000000e+00 : f32
    %9 = vector.broadcast %cst_1 : f32 to vector<1x1xf32>
    %10 = arith.cmpf ogt, %4, %9 : vector<1x1xf32>
    %11 = arith.divf %3, %8 : vector<1x1xf32>
    %cst_2 = arith.constant 0.000000e+00 : f32
    %12 = vector.broadcast %cst_2 : f32 to vector<1x1xf32>
    %13 = arith.select %10, %11, %12 : vector<1x1xi1>, vector<1x1xf32>
    %c0 = arith.constant 0 : index
    %c0_3 = arith.constant 0 : index
    %14 = vector.load %arg1[%c0, %c0_3] : memref<1x1xf32, #tpu.memory_space<vmem>>, vector<1x1xf32>
    tpu.vector_store %arg1[%c0, %c0_3], %13 {strides = array<i32>} : memref<1x1xf32, #tpu.memory_space<vmem>>, vector<1x1xf32>,
    return
  }
}

</mosaic_0001>

<llo_original>
// kernel: bi_cls_recall.1
$region0: #{bi_cls_recall.1}
  #allocation0 [shape = 'u32[]', space=smem, size = 0x4, offset = 0x4, fixed_abs, tag = 'smem constant byte address 0x4 - core index']
  #allocation1 [shape = 'u32[144,128]{1,0:T(1,128)}', space=vmem, size = 0x12000, scoped, tag = 'internal scratch']
  %s0 = inlined_call_operand.vmem [shape: f32[4], index: 0, kind: input, shape index: {}]
  %s1 = inlined_call_operand.hbm [shape: f32[1,1], index: 1, kind: output, shape index: {}]
  %s2 = sld [smem:[#allocation0]]
  $region18: #{bi_cls_recall.1} parent=0
    _
  %s4 = ssub.s32 1, %s2
  %s5 = scalar_select 0, %s4, %s2
  $region1: #{bi_cls_recall.1} parent=0
    #allocation2 [shape = 'u8[512]{0}', space=smem, size = 0x200, scoped, tag = 'input window, operand 0, single buffered']
    #allocation3 [shape = 's32[1]{0}', space=sflag, size = 0x4, scoped, tag = 'scoped memory for bi_cls_recall.1']
    #allocation4 [shape = 's32[1]{0}', space=sflag, size = 0x4, scoped, tag = 'scoped memory for bi_cls_recall.1']
    #allocation5 [shape = 'u8[512]{0}', space=vmem, size = 0x400, scoped, tag = 'output window, operand 0, single buffered']
    %6 = vsyncpa [#allocation4], 0
    %7 = vsyncpa [#allocation3], 0
    // Predicated region
    $region2: #{bi_cls_recall.1} parent=1 // pred_check
      _
    $region3: #{bi_cls_recall.1} parent=1 // pred_check_branch
      %9 = sbr.rel (0) target = $region5
    $region4: #{bi_cls_recall.1} parent=1 // pred_region
      %s11 = ssub.s32 16, 16
      %12 = vsyncadd [#allocation4], %s11
      %s14 = sshll.u32 %s0, 4
      %s15 = int_to_ptr.vmem [resolvable:$true] %s14
      %17 = dma.vmem_to_smem %s15, 16, [#allocation2], [#allocation4]
    $region5: #{bi_cls_recall.1} parent=1 // pred_fallthru
      _
    // Predicated region
    $region6: #{bi_cls_recall.1} parent=1 // pred_check
      _
    $region7: #{bi_cls_recall.1} parent=1 // pred_check_branch
      %19 = sbr.rel (0) target = $region9
    $region8: #{bi_cls_recall.1} parent=1 // pred_region
      %20 = dma.done [#allocation4], 16
    $region9: #{bi_cls_recall.1} parent=1 // pred_fallthru
      _
    %21 = sfence
    %s22 = sld [smem:[#allocation2 + $0x2]]
    %v23 = vstv %s22
    %s24 = sld [smem:[#allocation2 + $0x3]]
    %v25 = vstv %s24
    %v26 = vadd.f32 %v23, %v25
    %vm27 = vcmp.gt.f32.partialorder %v26, 0.0
    %v28 = vsel %vm27, %v26, 1.0
    %v29 = vrcp.pop %v28
    %v30 = vmul.f32 %v25, %v29
    %v31 = vsel %vm27, %v30, 0.0
    %vm32 = vcmask 0
    %33 = vst.msk [vmem:[#allocation5] sm:$0x1] %vm32, %v31
    // Predicated region
    $region10: #{bi_cls_recall.1} parent=1 // pred_check
      _
    $region11: #{bi_cls_recall.1} parent=1 // pred_check_branch
      %35 = sbr.rel (0) target = $region13
    $region12: #{bi_cls_recall.1} parent=1 // pred_region
      %s37 = ssub.s32 16, 16
      %38 = vsyncadd [#allocation3], %s37
      %s40 = sshll.u32 [#allocation5], 4
      %s41 = int_to_ptr.vmem [resolvable:$true] %s40
      %43 = dma.vmem_to_hbm [thread:$0]  %s41, 16, %s1, [#allocation3]
    $region13: #{bi_cls_recall.1} parent=1 // pred_fallthru
      _
    // Predicated region
    $region14: #{bi_cls_recall.1} parent=1 // pred_check
      _
    $region15: #{bi_cls_recall.1} parent=1 // pred_check_branch
      %45 = sbr.rel (0) target = $region17
    $region16: #{bi_cls_recall.1} parent=1 // pred_region
      %46 = dma.done [#allocation3], 16
    $region17: #{bi_cls_recall.1} parent=1 // pred_fallthru
      _
    %47 = vsyncpa [#allocation3], 1
    %48 = vsyncpa [#allocation4], 1

</llo_original>
